<compile_context>
chip_gen: v7x
topology: tpu7x:2x2x1
jax: 0.10.0
libtpu: 0.0.40
codegen_flags: <defaults>
</compile_context>

<pallas_src>
import functools

import jax
import jax.numpy as jnp
from jax.experimental import pallas as pl
from jax.experimental.pallas import tpu as pltpu


# ------------------------------ packing helpers ------------------------------


def _round_up(x, m):
    return ((x + m - 1) // m) * m


def _block_diag(mats):
    rows = sum(int(m.shape[0]) for m in mats)
    cols = sum(int(m.shape[1]) for m in mats)
    out = jnp.zeros((rows, cols), jnp.float32)
    r = c = 0
    for m in mats:
        out = out.at[r:r + m.shape[0], c:c + m.shape[1]].set(m)
        r += int(m.shape[0])
        c += int(m.shape[1])
    return out


def _pack_weight_slab(mats):
    """Row-stack 2-D weight matrices into one bf16 slab.

    Each block starts at a 16-sublane-aligned row offset (bf16 packs rows in
    pairs), so the in-kernel static slices are layout-friendly.
    Returns (slab, meta) with meta[k] = (row_offset, in_dim, out_dim).
    """
    max_out = max(int(m.shape[1]) for m in mats)
    blocks, meta, off = [], [], 0
    for m in mats:
        rows = _round_up(int(m.shape[0]), 16)
        blk = jnp.zeros((rows, max_out), jnp.bfloat16)
        blk = blk.at[:m.shape[0], :m.shape[1]].set(m.astype(jnp.bfloat16))
        blocks.append(blk)
        meta.append((off, int(m.shape[0]), int(m.shape[1])))
        off += rows
    return jnp.concatenate(blocks, axis=0), tuple(meta)


def _pack_bias_slab(vecs):
    """One f32 bias vector per sublane row; sliced as [k, :width] in-kernel."""
    max_w = max(int(v.shape[-1]) for v in vecs)
    rows = []
    for v in vecs:
        row = jnp.zeros((1, max_w), jnp.float32)
        row = row.at[:, :v.shape[-1]].set(v.reshape(1, -1).astype(jnp.float32))
        rows.append(row)
    return jnp.concatenate(rows, axis=0), tuple(int(v.shape[-1]) for v in vecs)


# ------------------------------- fused kernel --------------------------------


def _fused_forward_kernel(*refs, num_omics, w_meta, b_widths,
                          activation, activation_final):
    """Entire Omics_MACCS forward, everything VMEM-resident, concat-free.

    Ref order: [omic_x_0..omic_x_{n-1}], drug, weight_slab(bf16),
               bias_slab(f32), out.
    """
    omic_refs = refs[:num_omics]
    drug_ref = refs[num_omics]
    w_ref = refs[num_omics + 1]
    b_ref = refs[num_omics + 2]
    o_ref = refs[num_omics + 3]

    def act(x, name):
        if name == "relu":
            return jnp.maximum(x, 0.0)
        if name == "sigmoid":
            return jax.nn.sigmoid(x)
        return x

    def w(k):  # bf16 (in_dim, out_dim) weight block, static slice of the slab
        off, rin, rout = w_meta[k]
        return w_ref[off:off + rin, 0:rout]

    def b(k):  # f32 (1, width) bias row
        return b_ref[k:k + 1, 0:b_widths[k]]

    def dense(h, kw, kb):  # bf16 MXU dot, f32 accumulation, f32 bias add
        return jnp.dot(h.astype(jnp.bfloat16), w(kw),
                       preferred_element_type=jnp.float32) + b(kb)

    # ---- omic encoders, block-diagonalised (lane-dense dots) ----
    # layer 1: segmented accumulation over column-padded per-omic segments,
    # so the per-omic inputs are never concatenated.
    acc = b(0)
    for i in range(num_omics):
        x = omic_refs[i][...].astype(jnp.bfloat16)
        acc = acc + jnp.dot(x, w(i), preferred_element_type=jnp.float32)
    h1 = act(acc, activation)
    h2 = act(dense(h1, num_omics + 0, 1), activation_final)
    omic_emb = dense(h2, num_omics + 1, 2)                 # no act after last layer

    # ---- MACCS / drug encoder ----
    d = act(dense(drug_ref[...], num_omics + 2, 3), activation)
    d = act(dense(d, num_omics + 3, 4), activation)
    drug_emb = act(dense(d, num_omics + 4, 5), activation)

    # ---- final head (concat-free: W1 split into omic / drug row segments) ----
    f = (jnp.dot(omic_emb.astype(jnp.bfloat16), w(num_omics + 5),
                 preferred_element_type=jnp.float32)
         + jnp.dot(drug_emb.astype(jnp.bfloat16), w(num_omics + 6),
                   preferred_element_type=jnp.float32)
         + b(6))
    f = act(f, activation)                                  # Dropout(p=0) == identity
    f = act(dense(f, num_omics + 7, 7), activation)         # Dropout(p=0) == identity
    # last Linear(dense, 1): VPU multiply + lane reduction instead of N=1 MXU dot
    wf3_row = w(num_omics + 8).astype(jnp.float32)          # (1, dense)
    logit = jnp.sum(f * wf3_row, axis=-1, keepdims=True) + b(8)
    o_ref[...] = act(logit, activation_final).astype(o_ref.dtype)


# --------------------------------- forward -----------------------------------


def omics_maccs_forward(omics_tensor_dict, drug, params,
                        activation="relu", activation_final="sigmoid"):
    """Single fused pallas_call implementing Omics_MACCS_Model.forward."""
    omic_types = tuple(omics_tensor_dict.keys())
    assert omic_types == tuple(params["omics"].keys()), \
        "omics_tensor_dict and params['omics'] must have the same key order"
    num_omics = len(omic_types)
    batch = int(drug.shape[0])

    d0s = [int(params["omics"][t][0][0].shape[1]) for t in omic_types]
    d1s = [int(params["omics"][t][1][0].shape[1]) for t in omic_types]
    d2s = [int(params["omics"][t][2][0].shape[1]) for t in omic_types]
    sum_d0, sum_d1, sum_d2 = sum(d0s), sum(d1s), sum(d2s)

    # ---- block-diagonalise the omic encoders ----
    w1_segs, c = [], 0
    for i, t in enumerate(omic_types):
        w1 = params["omics"][t][0][0]
        seg = jnp.zeros((int(w1.shape[0]), sum_d0), jnp.float32)
        seg = seg.at[:, c:c + d0s[i]].set(w1)
        w1_segs.append(seg)
        c += d0s[i]
    w2_bd = _block_diag([params["omics"][t][1][0] for t in omic_types])
    w3_bd = _block_diag([params["omics"][t][2][0] for t in omic_types])
    b1_cat = jnp.concatenate([params["omics"][t][0][1].reshape(1, -1) for t in omic_types], axis=1)
    b2_cat = jnp.concatenate([params["omics"][t][1][1].reshape(1, -1) for t in omic_types], axis=1)
    b3_cat = jnp.concatenate([params["omics"][t][2][1].reshape(1, -1) for t in omic_types], axis=1)

    (wd1, bd1), (wd2, bd2), (wd3, bd3) = params["drug"]
    (wf1, bf1), (wf2, bf2), (wf3, bf3) = params["final"]
    e2 = int(wd3.shape[1])
    dense_dim = int(wf1.shape[1])
    assert int(wf1.shape[0]) == sum_d2 + e2, "dense_layer_dim mismatch"

    # ---- pack everything into two slabs (few DMA descriptors) ----
    w_mats = (w1_segs + [w2_bd, w3_bd, wd1, wd2, wd3,
                         wf1[:sum_d2, :], wf1[sum_d2:, :], wf2, wf3.T])
    w_slab, w_meta = _pack_weight_slab(w_mats)
    b_slab, b_widths = _pack_bias_slab(
        [b1_cat, b2_cat, b3_cat, bd1, bd2, bd3, bf1, bf2, bf3])

    # ---- batch grid ("parallel" -> both TensorCores on v7x at real batch) ----
    bt = batch if batch <= 256 else 256
    assert batch % bt == 0, "batch must be a multiple of 256 when > 256"
    grid = (batch // bt,)

    omic_inputs = [omics_tensor_dict[t].astype(jnp.float32) for t in omic_types]
    drug_f = drug.astype(jnp.float32)   # int8 trick dropped: same padded tile, no unpack
    args = omic_inputs + [drug_f, w_slab, b_slab]

    def batched(feat):
        return pl.BlockSpec((bt, feat), lambda b: (b, 0))

    def replicated(a):
        return pl.BlockSpec(a.shape, lambda b: (0, 0))

    in_specs = ([batched(int(x.shape[1])) for x in omic_inputs]
                + [batched(int(drug_f.shape[1])), replicated(w_slab), replicated(b_slab)])
    out_specs = pl.BlockSpec((bt, 1), lambda b: (b, 0))

    # advisory cost estimate for the XLA scheduler (MXU blocks + final VPU reduce)
    flops = sum(2 * batch * rin * rout for (_, rin, rout) in w_meta[:-1]) + 2 * batch * dense_dim
    transcend = batch * (sum_d1 + 1) if activation_final == "sigmoid" else 0
    bytes_accessed = sum(int(a.size) * a.dtype.itemsize for a in args) + batch * 4

    kernel = functools.partial(
        _fused_forward_kernel,
        num_omics=num_omics, w_meta=w_meta, b_widths=b_widths,
        activation=activation, activation_final=activation_final)

    return pl.pallas_call(
        kernel,
        grid=grid,
        in_specs=in_specs,
        out_specs=out_specs,
        out_shape=jax.ShapeDtypeStruct((batch, 1), jnp.float32),
        compiler_params=pltpu.CompilerParams(
            dimension_semantics=("parallel",),
            vmem_limit_bytes=32 * 1024 * 1024),
        cost_estimate=pl.CostEstimate(flops=flops, transcendentals=transcend,
                                      bytes_accessed=bytes_accessed),
    )(*args)


# ------------------------------ parameter init -------------------------------


def _kaiming_linear(key, fan_in, fan_out):
    # Matches Omics_MACCS_Model._init_weights:
    #   kaiming_uniform_(a=0, mode='fan_in', nonlinearity='relu') -> bound = sqrt(6/fan_in)
    #   init.zeros_(bias)  (zero bias IS what the PyTorch module does)
    bound = (6.0 / fan_in) ** 0.5
    w = jax.random.uniform(key, (fan_in, fan_out), jnp.float32, -bound, bound)
    b = jnp.zeros((1, fan_out), jnp.float32)
    return w, b


def init_params(key, omics_numfeatures_dict, omics_encode_dim_dict, drug_encode_dims,
                dense_layer_dim):
    params = {"omics": {}, "drug": None, "final": None}

    for omic_type in omics_numfeatures_dict:
        dims = [omics_numfeatures_dict[omic_type]] + list(omics_encode_dim_dict[omic_type])
        layers = []
        for i in range(3):
            key, sub = jax.random.split(key)
            layers.append(_kaiming_linear(sub, dims[i], dims[i + 1]))
        params["omics"][omic_type] = tuple(layers)

    drug_dims = [166] + list(drug_encode_dims)
    layers = []
    for i in range(3):
        key, sub = jax.random.split(key)
        layers.append(_kaiming_linear(sub, drug_dims[i], drug_dims[i + 1]))
    params["drug"] = tuple(layers)

    final_dims = [dense_layer_dim, dense_layer_dim, dense_layer_dim, 1]
    layers = []
    for i in range(3):
        key, sub = jax.random.split(key)
        layers.append(_kaiming_linear(sub, final_dims[i], final_dims[i + 1]))
    params["final"] = tuple(layers)

    return params


# ---------------------------- pure-JAX reference -----------------------------


def _reference_forward(omics_tensor_dict, drug, params,
                       activation="relu", activation_final="sigmoid"):
    hp = jax.lax.Precision.HIGHEST

    def act(x, name):
        if name == "relu":
            return jnp.maximum(x, 0.0)
        if name == "sigmoid":
            return jax.nn.sigmoid(x)
        return x

    def mlp3(x, layers, names):
        h = x.astype(jnp.float32)
        for (wt, bs), nm in zip(layers, names):
            h = act(jnp.dot(h, wt, precision=hp) + bs, nm)
        return h

    embs = [mlp3(omics_tensor_dict[t], params["omics"][t],
                 (activation, activation_final, "none")) for t in omics_tensor_dict]
    d = mlp3(drug, params["drug"], (activation, activation, activation))
    combined = jnp.concatenate(embs + [d], axis=1)
    return mlp3(combined, params["final"], (activation, activation, activation_final))


# ----------------------------------- main ------------------------------------


if __name__ == "__main__":
    batch = 8
    omics_numfeatures_dict = {"mutation": 32, "expression": 64}
    omics_encode_dim_dict = {"mutation": (32, 16, 8), "expression": (32, 16, 8)}
    drug_encode_dims = (64, 32, 16)
    dense_layer_dim = sum(d[2] for d in omics_encode_dim_dict.values()) + drug_encode_dims[2]  # 32

    key = jax.random.PRNGKey(0)
    key, k_mut, k_expr, k_drug, k_params = jax.random.split(key, 5)

    omics_tensor_dict = {
        "mutation": jax.random.normal(k_mut, (batch, omics_numfeatures_dict["mutation"]),
                                      jnp.float32),
        "expression": jax.random.normal(k_expr, (batch, omics_numfeatures_dict["expression"]),
                                        jnp.float32),
    }
    # MACCS keys: 166-bit binary fingerprint, fed as f32 0/1.
    drug = (jax.random.uniform(k_drug, (batch, 166)) > 0.5).astype(jnp.float32)

    params = init_params(k_params, omics_numfeatures_dict, omics_encode_dim_dict,
                         drug_encode_dims, dense_layer_dim)

    out = jax.block_until_ready(omics_maccs_forward(omics_tensor_dict, drug, params))
    assert out.shape == (batch, 1), out.shape

    ref = jax.block_until_ready(_reference_forward(omics_tensor_dict, drug, params))
    # bf16 weights + bf16 MXU inputs (f32 accumulation) vs an f32 HIGHEST-precision
    # reference: tolerance set accordingly.
    assert jnp.allclose(out, ref, rtol=3e-2, atol=3e-2), (out, ref, jnp.abs(out - ref).max())

    print("KERNEL_OK")
</pallas_src>

<mosaic_0001>
module attributes {stable_mosaic.version = 11 : i64} {
  func.func @_fused_forward_kernel(%arg0: i32, %arg1: memref<8x32xf32, #tpu.memory_space<vmem>>, %arg2: memref<8x64xf32, #tpu.memory_space<vmem>>, %arg3: memref<8x166xf32, #tpu.memory_space<vmem>>, %arg4: memref<544x64xbf16, #tpu.memory_space<vmem>>, %arg5: memref<9x64xf32, #tpu.memory_space<vmem>>, %arg6: memref<8x1xf32, #tpu.memory_space<vmem>>) attributes {dimension_semantics = [#tpu.dimension_semantics<parallel>], iteration_bounds = array<i64: 1>, scalar_prefetch = 0 : i64, scratch_operands = 0 : i64, tpu.core_type = #tpu.core_type<tc>, window_params = [{transform_indices = @transform_0, window_bounds = array<i64: 8, 32>}, {transform_indices = @transform_1, window_bounds = array<i64: 8, 64>}, {transform_indices = @transform_2, window_bounds = array<i64: 8, 166>}, {pipeline_mode = #tpu.pipeline_mode<synchronous>, transform_indices = @transform_3, window_bounds = array<i64: 544, 64>}, {pipeline_mode = #tpu.pipeline_mode<synchronous>, transform_indices = @transform_4, window_bounds = array<i64: 9, 64>}, {transform_indices = @transform_5, window_bounds = array<i64: 8, 1>}]} {
    %c0 = arith.constant 0 : index
    %c0_0 = arith.constant 0 : index
    %0 = vector.load %arg5[%c0, %c0_0] : memref<9x64xf32, #tpu.memory_space<vmem>>, vector<1x64xf32>
    %c0_1 = arith.constant 0 : index
    %c0_2 = arith.constant 0 : index
    %1 = vector.load %arg1[%c0_1, %c0_2] : memref<8x32xf32, #tpu.memory_space<vmem>>, vector<8x32xf32>
    %2 = arith.truncf %1 : vector<8x32xf32> to vector<8x32xbf16>
    %c0_3 = arith.constant 0 : index
    %c0_4 = arith.constant 0 : index
    %3 = vector.load %arg4[%c0_3, %c0_4] : memref<544x64xbf16, #tpu.memory_space<vmem>>, vector<32x64xbf16>
    %cst = arith.constant dense<0.000000e+00> : vector<8x64xf32>
    %4 = tpu.matmul %2, %3, %cst {dimension_numbers = #tpu.dot_dimension_numbers<[1], [0], [0], [1], [0, 0, 1, 1], [], []>} : vector<8x32xbf16>, vector<32x64xbf16>, vector<8x64xf32> -> vector<8x64xf32>
    %5 = vector.broadcast %0 : vector<1x64xf32> to vector<8x64xf32>
    %6 = arith.addf %5, %4 : vector<8x64xf32>
    %c0_5 = arith.constant 0 : index
    %c0_6 = arith.constant 0 : index
    %7 = vector.load %arg2[%c0_5, %c0_6] : memref<8x64xf32, #tpu.memory_space<vmem>>, vector<8x64xf32>
    %8 = arith.truncf %7 : vector<8x64xf32> to vector<8x64xbf16>
    %c32 = arith.constant 32 : index
    %c0_7 = arith.constant 0 : index
    %9 = vector.load %arg4[%c32, %c0_7] : memref<544x64xbf16, #tpu.memory_space<vmem>>, vector<64x64xbf16>
    %cst_8 = arith.constant dense<0.000000e+00> : vector<8x64xf32>
    %10 = tpu.matmul %8, %9, %cst_8 {dimension_numbers = #tpu.dot_dimension_numbers<[1], [0], [0], [1], [0, 0, 1, 1], [], []>} : vector<8x64xbf16>, vector<64x64xbf16>, vector<8x64xf32> -> vector<8x64xf32>
    %11 = arith.addf %6, %10 : vector<8x64xf32>
    %cst_9 = arith.constant 0.000000e+00 : f32
    %12 = vector.broadcast %cst_9 : f32 to vector<8x64xf32>
    %13 = arith.maximumf %11, %12 : vector<8x64xf32>
    %14 = arith.truncf %13 : vector<8x64xf32> to vector<8x64xbf16>
    %c96 = arith.constant 96 : index
    %c0_10 = arith.constant 0 : index
    %15 = vector.load %arg4[%c96, %c0_10] : memref<544x64xbf16, #tpu.memory_space<vmem>>, vector<64x32xbf16>
    %cst_11 = arith.constant dense<0.000000e+00> : vector<8x32xf32>
    %16 = tpu.matmul %14, %15, %cst_11 {dimension_numbers = #tpu.dot_dimension_numbers<[1], [0], [0], [1], [0, 0, 1, 1], [], []>} : vector<8x64xbf16>, vector<64x32xbf16>, vector<8x32xf32> -> vector<8x32xf32>
    %c1 = arith.constant 1 : index
    %c0_12 = arith.constant 0 : index
    %17 = vector.load %arg5[%c1, %c0_12] : memref<9x64xf32, #tpu.memory_space<vmem>>, vector<1x32xf32>
    %18 = vector.broadcast %17 : vector<1x32xf32> to vector<8x32xf32>
    %19 = arith.addf %16, %18 : vector<8x32xf32>
    %20 = arith.negf %19 : vector<8x32xf32>
    %21 = math.exp %20 : vector<8x32xf32>
    %cst_13 = arith.constant 1.000000e+00 : f32
    %22 = vector.broadcast %cst_13 : f32 to vector<8x32xf32>
    %23 = arith.addf %22, %21 : vector<8x32xf32>
    %24 = arith.divf %22, %23 : vector<8x32xf32>
    %25 = arith.truncf %24 : vector<8x32xf32> to vector<8x32xbf16>
    %c160 = arith.constant 160 : index
    %c0_14 = arith.constant 0 : index
    %26 = vector.load %arg4[%c160, %c0_14] : memref<544x64xbf16, #tpu.memory_space<vmem>>, vector<32x16xbf16>
    %cst_15 = arith.constant dense<0.000000e+00> : vector<8x16xf32>
    %27 = tpu.matmul %25, %26, %cst_15 {dimension_numbers = #tpu.dot_dimension_numbers<[1], [0], [0], [1], [0, 0, 1, 1], [], []>} : vector<8x32xbf16>, vector<32x16xbf16>, vector<8x16xf32> -> vector<8x16xf32>
    %c2 = arith.constant 2 : index
    %c0_16 = arith.constant 0 : index
    %28 = vector.load %arg5[%c2, %c0_16] : memref<9x64xf32, #tpu.memory_space<vmem>>, vector<1x16xf32>
    %29 = vector.broadcast %28 : vector<1x16xf32> to vector<8x16xf32>
    %30 = arith.addf %27, %29 : vector<8x16xf32>
    %c0_17 = arith.constant 0 : index
    %c0_18 = arith.constant 0 : index
    %31 = vector.load %arg3[%c0_17, %c0_18] : memref<8x166xf32, #tpu.memory_space<vmem>>, vector<8x166xf32>
    %32 = arith.truncf %31 : vector<8x166xf32> to vector<8x166xbf16>
    %c192 = arith.constant 192 : index
    %c0_19 = arith.constant 0 : index
    %33 = vector.load %arg4[%c192, %c0_19] : memref<544x64xbf16, #tpu.memory_space<vmem>>, vector<166x64xbf16>
    %cst_20 = arith.constant dense<0.000000e+00> : vector<8x64xf32>
    %34 = tpu.matmul %32, %33, %cst_20 {dimension_numbers = #tpu.dot_dimension_numbers<[1], [0], [0], [1], [0, 0, 1, 1], [], []>} : vector<8x166xbf16>, vector<166x64xbf16>, vector<8x64xf32> -> vector<8x64xf32>
    %c3 = arith.constant 3 : index
    %c0_21 = arith.constant 0 : index
    %35 = vector.load %arg5[%c3, %c0_21] : memref<9x64xf32, #tpu.memory_space<vmem>>, vector<1x64xf32>
    %36 = vector.broadcast %35 : vector<1x64xf32> to vector<8x64xf32>
    %37 = arith.addf %34, %36 : vector<8x64xf32>
    %cst_22 = arith.constant 0.000000e+00 : f32
    %38 = vector.broadcast %cst_22 : f32 to vector<8x64xf32>
    %39 = arith.maximumf %37, %38 : vector<8x64xf32>
    %40 = arith.truncf %39 : vector<8x64xf32> to vector<8x64xbf16>
    %c368 = arith.constant 368 : index
    %c0_23 = arith.constant 0 : index
    %41 = vector.load %arg4[%c368, %c0_23] : memref<544x64xbf16, #tpu.memory_space<vmem>>, vector<64x32xbf16>
    %cst_24 = arith.constant dense<0.000000e+00> : vector<8x32xf32>
    %42 = tpu.matmul %40, %41, %cst_24 {dimension_numbers = #tpu.dot_dimension_numbers<[1], [0], [0], [1], [0, 0, 1, 1], [], []>} : vector<8x64xbf16>, vector<64x32xbf16>, vector<8x32xf32> -> vector<8x32xf32>
    %c4 = arith.constant 4 : index
    %c0_25 = arith.constant 0 : index
    %43 = vector.load %arg5[%c4, %c0_25] : memref<9x64xf32, #tpu.memory_space<vmem>>, vector<1x32xf32>
    %44 = vector.broadcast %43 : vector<1x32xf32> to vector<8x32xf32>
    %45 = arith.addf %42, %44 : vector<8x32xf32>
    %cst_26 = arith.constant 0.000000e+00 : f32
    %46 = vector.broadcast %cst_26 : f32 to vector<8x32xf32>
    %47 = arith.maximumf %45, %46 : vector<8x32xf32>
    %48 = arith.truncf %47 : vector<8x32xf32> to vector<8x32xbf16>
    %c432 = arith.constant 432 : index
    %c0_27 = arith.constant 0 : index
    %49 = vector.load %arg4[%c432, %c0_27] : memref<544x64xbf16, #tpu.memory_space<vmem>>, vector<32x16xbf16>
    %cst_28 = arith.constant dense<0.000000e+00> : vector<8x16xf32>
    %50 = tpu.matmul %48, %49, %cst_28 {dimension_numbers = #tpu.dot_dimension_numbers<[1], [0], [0], [1], [0, 0, 1, 1], [], []>} : vector<8x32xbf16>, vector<32x16xbf16>, vector<8x16xf32> -> vector<8x16xf32>
    %c5 = arith.constant 5 : index
    %c0_29 = arith.constant 0 : index
    %51 = vector.load %arg5[%c5, %c0_29] : memref<9x64xf32, #tpu.memory_space<vmem>>, vector<1x16xf32>
    %52 = vector.broadcast %51 : vector<1x16xf32> to vector<8x16xf32>
    %53 = arith.addf %50, %52 : vector<8x16xf32>
    %cst_30 = arith.constant 0.000000e+00 : f32
    %54 = vector.broadcast %cst_30 : f32 to vector<8x16xf32>
    %55 = arith.maximumf %53, %54 : vector<8x16xf32>
    %56 = arith.truncf %30 : vector<8x16xf32> to vector<8x16xbf16>
    %c464 = arith.constant 464 : index
    %c0_31 = arith.constant 0 : index
    %57 = vector.load %arg4[%c464, %c0_31] : memref<544x64xbf16, #tpu.memory_space<vmem>>, vector<16x32xbf16>
    %cst_32 = arith.constant dense<0.000000e+00> : vector<8x32xf32>
    %58 = tpu.matmul %56, %57, %cst_32 {dimension_numbers = #tpu.dot_dimension_numbers<[1], [0], [0], [1], [0, 0, 1, 1], [], []>} : vector<8x16xbf16>, vector<16x32xbf16>, vector<8x32xf32> -> vector<8x32xf32>
    %59 = arith.truncf %55 : vector<8x16xf32> to vector<8x16xbf16>
    %c480 = arith.constant 480 : index
    %c0_33 = arith.constant 0 : index
    %60 = vector.load %arg4[%c480, %c0_33] : memref<544x64xbf16, #tpu.memory_space<vmem>>, vector<16x32xbf16>
    %cst_34 = arith.constant dense<0.000000e+00> : vector<8x32xf32>
    %61 = tpu.matmul %59, %60, %cst_34 {dimension_numbers = #tpu.dot_dimension_numbers<[1], [0], [0], [1], [0, 0, 1, 1], [], []>} : vector<8x16xbf16>, vector<16x32xbf16>, vector<8x32xf32> -> vector<8x32xf32>
    %62 = arith.addf %58, %61 : vector<8x32xf32>
    %c6 = arith.constant 6 : index
    %c0_35 = arith.constant 0 : index
    %63 = vector.load %arg5[%c6, %c0_35] : memref<9x64xf32, #tpu.memory_space<vmem>>, vector<1x32xf32>
    %64 = vector.broadcast %63 : vector<1x32xf32> to vector<8x32xf32>
    %65 = arith.addf %62, %64 : vector<8x32xf32>
    %cst_36 = arith.constant 0.000000e+00 : f32
    %66 = vector.broadcast %cst_36 : f32 to vector<8x32xf32>
    %67 = arith.maximumf %65, %66 : vector<8x32xf32>
    %68 = arith.truncf %67 : vector<8x32xf32> to vector<8x32xbf16>
    %c496 = arith.constant 496 : index
    %c0_37 = arith.constant 0 : index
    %69 = vector.load %arg4[%c496, %c0_37] : memref<544x64xbf16, #tpu.memory_space<vmem>>, vector<32x32xbf16>
    %cst_38 = arith.constant dense<0.000000e+00> : vector<8x32xf32>
    %70 = tpu.matmul %68, %69, %cst_38 {dimension_numbers = #tpu.dot_dimension_numbers<[1], [0], [0], [1], [0, 0, 1, 1], [], []>} : vector<8x32xbf16>, vector<32x32xbf16>, vector<8x32xf32> -> vector<8x32xf32>
    %c7 = arith.constant 7 : index
    %c0_39 = arith.constant 0 : index
    %71 = vector.load %arg5[%c7, %c0_39] : memref<9x64xf32, #tpu.memory_space<vmem>>, vector<1x32xf32>
    %72 = vector.broadcast %71 : vector<1x32xf32> to vector<8x32xf32>
    %73 = arith.addf %70, %72 : vector<8x32xf32>
    %cst_40 = arith.constant 0.000000e+00 : f32
    %74 = vector.broadcast %cst_40 : f32 to vector<8x32xf32>
    %75 = arith.maximumf %73, %74 : vector<8x32xf32>
    %c528 = arith.constant 528 : index
    %c0_41 = arith.constant 0 : index
    %76 = vector.load %arg4[%c528, %c0_41] : memref<544x64xbf16, #tpu.memory_space<vmem>>, vector<1x32xbf16>
    %77 = arith.extf %76 : vector<1x32xbf16> to vector<1x32xf32>
    %78 = vector.broadcast %77 : vector<1x32xf32> to vector<8x32xf32>
    %79 = arith.mulf %75, %78 : vector<8x32xf32>
    %cst_42 = arith.constant dense<0.000000e+00> : vector<8xf32>
    %80 = vector.multi_reduction <add>, %79, %cst_42 [1] : vector<8x32xf32> to vector<8xf32>
    %81 = vector.shape_cast %80 : vector<8xf32> to vector<8x1xf32>
    %c8 = arith.constant 8 : index
    %c0_43 = arith.constant 0 : index
    %82 = vector.load %arg5[%c8, %c0_43] : memref<9x64xf32, #tpu.memory_space<vmem>>, vector<1x1xf32>
    %83 = vector.broadcast %82 : vector<1x1xf32> to vector<8x1xf32>
    %84 = arith.addf %81, %83 : vector<8x1xf32>
    %85 = arith.negf %84 : vector<8x1xf32>
    %86 = math.exp %85 : vector<8x1xf32>
    %cst_44 = arith.constant 1.000000e+00 : f32
    %87 = vector.broadcast %cst_44 : f32 to vector<8x1xf32>
    %88 = arith.addf %87, %86 : vector<8x1xf32>
    %89 = arith.divf %87, %88 : vector<8x1xf32>
    %c0_45 = arith.constant 0 : index
    %c0_46 = arith.constant 0 : index
    %90 = vector.load %arg6[%c0_45, %c0_46] : memref<8x1xf32, #tpu.memory_space<vmem>>, vector<8x1xf32>
    tpu.vector_store %arg6[%c0_45, %c0_46], %89 {strides = array<i32>} : memref<8x1xf32, #tpu.memory_space<vmem>>, vector<8x1xf32>,
    return
  }
  func.func @transform_0(%arg0: i32) -> (i32, i32) {
    %c0_i32 = arith.constant 0 : i32
    %c0_i32_0 = arith.constant 0 : i32
    return %arg0, %c0_i32 : i32, i32
  }
  func.func @transform_1(%arg0: i32) -> (i32, i32) {
    %c0_i32 = arith.constant 0 : i32
    %c0_i32_0 = arith.constant 0 : i32
    return %arg0, %c0_i32 : i32, i32
  }
  func.func @transform_2(%arg0: i32) -> (i32, i32) {
    %c0_i32 = arith.constant 0 : i32
    %c0_i32_0 = arith.constant 0 : i32
    return %arg0, %c0_i32 : i32, i32
  }
  func.func @transform_3(%arg0: i32) -> (i32, i32) {
    %c0_i32 = arith.constant 0 : i32
    %c0_i32_0 = arith.constant 0 : i32
    %c0_i32_1 = arith.constant 0 : i32
    return %c0_i32, %c0_i32_0 : i32, i32
  }
  func.func @transform_4(%arg0: i32) -> (i32, i32) {
    %c0_i32 = arith.constant 0 : i32
    %c0_i32_0 = arith.constant 0 : i32
    %c0_i32_1 = arith.constant 0 : i32
    return %c0_i32, %c0_i32_0 : i32, i32
  }
  func.func @transform_5(%arg0: i32) -> (i32, i32) {
    %c0_i32 = arith.constant 0 : i32
    %c0_i32_0 = arith.constant 0 : i32
    return %arg0, %c0_i32 : i32, i32
  }
}

</mosaic_0001>

<llo_original>
// kernel: tpu_custom_call.1
$region0: #{tpu_custom_call.1}
  #allocation0 [shape = 'u32[]', space=smem, size = 0x4, offset = 0x4, fixed_abs, tag = 'smem constant byte address 0x4 - core index']
  #allocation1 [shape = 'u32[144,128]{1,0:T(1,128)}', space=vmem, size = 0x12000, scoped, tag = 'internal scratch']
  %s0 = inlined_call_operand.vmem [shape: f32[8,32], index: 0, kind: input, shape index: {}]
  %s1 = inlined_call_operand.vmem [shape: f32[8,64], index: 1, kind: input, shape index: {}]
  %s2 = inlined_call_operand.vmem [shape: f32[8,166], index: 2, kind: input, shape index: {}]
  %s3 = inlined_call_operand.vmem [shape: bf16[544,64], index: 3, kind: input, shape index: {}]
  %s4 = inlined_call_operand.vmem [shape: f32[9,64], index: 4, kind: input, shape index: {}]
  %s5 = inlined_call_operand.vmem [shape: f32[8,1], index: 5, kind: output, shape index: {}]
  %s6 = sld [smem:[#allocation0]]
  $region30: #{tpu_custom_call.1} parent=0
    _
  %s8 = ssub.s32 1, %s6
  %s9 = scalar_select 0, %s8, %s6
  // Predicated region
  $region2: #{tpu_custom_call.1} parent=0 // pred_check
    _
  $region3: #{tpu_custom_call.1} parent=0 // pred_check_branch
    %11 = sbr.rel (0) target = $region5
  $region4: #{tpu_custom_call.1} parent=0 // pred_region
    _
  $region5: #{tpu_custom_call.1} parent=0 // pred_fallthru
    _
  // Predicated region
  $region6: #{tpu_custom_call.1} parent=0 // pred_check
    _
  $region7: #{tpu_custom_call.1} parent=0 // pred_check_branch
    %13 = sbr.rel (0) target = $region9
  $region8: #{tpu_custom_call.1} parent=0 // pred_region
    _
  $region9: #{tpu_custom_call.1} parent=0 // pred_fallthru
    _
  // Predicated region
  $region10: #{tpu_custom_call.1} parent=0 // pred_check
    _
  $region11: #{tpu_custom_call.1} parent=0 // pred_check_branch
    %15 = sbr.rel (0) target = $region13
  $region12: #{tpu_custom_call.1} parent=0 // pred_region
    _
  $region13: #{tpu_custom_call.1} parent=0 // pred_fallthru
    _
  // Predicated region
  $region14: #{tpu_custom_call.1} parent=0 // pred_check
    _
  $region15: #{tpu_custom_call.1} parent=0 // pred_check_branch
    %17 = sbr.rel (0) target = $region17
  $region16: #{tpu_custom_call.1} parent=0 // pred_region
    _
  $region17: #{tpu_custom_call.1} parent=0 // pred_fallthru
    _
  // Predicated region
  $region18: #{tpu_custom_call.1} parent=0 // pred_check
    _
  $region19: #{tpu_custom_call.1} parent=0 // pred_check_branch
    %19 = sbr.rel (0) target = $region21
  $region20: #{tpu_custom_call.1} parent=0 // pred_region
    _
  $region21: #{tpu_custom_call.1} parent=0 // pred_fallthru
    _
  %v21 = vld [vmem:[%s4] sm:$0x1]
  %v22 = vld [vmem:[%s0] sm:$0xff]
  %v23 = vpack.c.bf16 %v22, %v22
  %v24 = vld [vmem:[%s3] sm:$0xf]
  %v25 = vld [vmem:[%s3 + $0x4] sm:$0xf]
  %v26 = vld [vmem:[%s3 + $0x8] sm:$0xf]
  %v27 = vld [vmem:[%s3 + $0xc] sm:$0xf]
  %v32 = vunpack.c.l.b16 %v24
  %v33 = vunpack.c.l.b16 %v25
  %v34 = vunpack.c.l.b16 %v26
  %v35 = vunpack.c.l.b16 %v27
  %v36 = vpack.c.b16 %v33, %v32
  %v37 = vpack.c.b16 %v35, %v34
  %vm40 = vcmask 261120
  %v42 = vsel %vm40, %v23, 0
  %44 = vmatprep.subr.bf16.mxu0 0
  %45 = vmatpush1.bf16.msra.mxu0 %v36
  %46 = vmatprep.subr.bf16.mxu0 0
  %47 = vmatpush1.bf16.msra.mxu0 %v37
  %48 = vmatprep.subr.bf16.mxu0 0
  %49 = vmatpush1.bf16.msra.mxu0 0
  %50 = vmatprep.subr.bf16.mxu0 0
  %51 = vmatpush1.bf16.msra.mxu0 0
  %52 = vmatprep.subr.bf16.mxu0 0
  %53 = vmatpush1.bf16.msra.mxu0 0
  %54 = vmatprep.subr.bf16.mxu0 0
  %55 = vmatpush1.bf16.msra.mxu0 0
  %56 = vmatprep.subr.bf16.mxu0 0
  %57 = vmatpush1.bf16.msra.mxu0 0
  %58 = vmatprep.subr.bf16.mxu0 0
  %59 = vmatpush1.bf16.msra.mxu0 0
  %60 = vmatprep.subr.bf16.mxu0 0
  %61 = vmatpush1.bf16.msra.mxu0 0
  %62 = vmatprep.subr.bf16.mxu0 0
  %63 = vmatpush1.bf16.msra.mxu0 0
  %64 = vmatprep.subr.bf16.mxu0 0
  %65 = vmatpush1.bf16.msra.mxu0 0
  %66 = vmatprep.subr.bf16.mxu0 0
  %67 = vmatpush1.bf16.msra.mxu0 0
  %68 = vmatprep.subr.bf16.mxu0 0
  %69 = vmatpush1.bf16.msra.mxu0 0
  %70 = vmatprep.subr.bf16.mxu0 0
  %71 = vmatpush1.bf16.msra.mxu0 0
  %72 = vmatprep.subr.bf16.mxu0 0
  %73 = vmatpush1.bf16.msra.mxu0 0
  %74 = vmatprep.subr.bf16.mxu0 0
  %75 = vmatpush1.bf16.msra.mxu0 0
  %76 = vmatprep.mubr.bf16.mxu0 0
  %77 = vmatmul.mubr.bf16.gmra.mrb[0].mxu0 %v42
  %v78 = vpop.f32.mrb[0].mxu0
  %v79 = vadd.f32 0.0, %v78
  %v80 = vpop.f32.mrb[0].mxu0
  %v81 = vpop.f32.mrb[0].mxu0
  %v82 = vpop.f32.mrb[0].mxu0
  %83 = vdwg.mxu0
  %v84 = vlaneseq
  %v85 = vshrl.u32 %v84, 7
  %v86 = vsub.s32 0, %v85
  %v87 = vrot.slane %v21, %v86
  %v88 = vadd.f32 %v87, %v79
  %v89 = vld [vmem:[%s1] sm:$0xff]
  %v90 = vpack.c.bf16 %v89, %v89
  %v91 = vld [vmem:[%s3 + $0x10] sm:$0xf]
  %v92 = vld [vmem:[%s3 + $0x14] sm:$0xf]
  %v93 = vld [vmem:[%s3 + $0x18] sm:$0xf]
  %v94 = vld [vmem:[%s3 + $0x1c] sm:$0xf]
  %v95 = vld [vmem:[%s3 + $0x20] sm:$0xf]
  %v96 = vld [vmem:[%s3 + $0x24] sm:$0xf]
  %v97 = vld [vmem:[%s3 + $0x28] sm:$0xf]
  %v98 = vld [vmem:[%s3 + $0x2c] sm:$0xf]
  %v107 = vunpack.c.l.b16 %v91
  %v108 = vunpack.c.l.b16 %v92
  %v109 = vunpack.c.l.b16 %v93
  %v110 = vunpack.c.l.b16 %v94
  %v111 = vunpack.c.l.b16 %v95
  %v112 = vunpack.c.l.b16 %v96
  %v113 = vunpack.c.l.b16 %v97
  %v114 = vunpack.c.l.b16 %v98
  %v115 = vpack.c.b16 %v108, %v107
  %v116 = vpack.c.b16 %v110, %v109
  %v117 = vpack.c.b16 %v112, %v111
  %v118 = vpack.c.b16 %v114, %v113
  %vm123 = vcmask 523264
  %v125 = vsel %vm123, %v90, 0
  %127 = vmatprep.subr.bf16.mxu0 0
  %128 = vmatpush1.bf16.msra.mxu0 %v115
  %129 = vmatprep.subr.bf16.mxu0 0
  %130 = vmatpush1.bf16.msra.mxu0 %v116
  %131 = vmatprep.subr.bf16.mxu0 0
  %132 = vmatpush1.bf16.msra.mxu0 %v117
  %133 = vmatprep.subr.bf16.mxu0 0
  %134 = vmatpush1.bf16.msra.mxu0 %v118
  %135 = vmatprep.subr.bf16.mxu0 0
  %136 = vmatpush1.bf16.msra.mxu0 0
  %137 = vmatprep.subr.bf16.mxu0 0
  %138 = vmatpush1.bf16.msra.mxu0 0
  %139 = vmatprep.subr.bf16.mxu0 0
  %140 = vmatpush1.bf16.msra.mxu0 0
  %141 = vmatprep.subr.bf16.mxu0 0
  %142 = vmatpush1.bf16.msra.mxu0 0
  %143 = vmatprep.subr.bf16.mxu0 0
  %144 = vmatpush1.bf16.msra.mxu0 0
  %145 = vmatprep.subr.bf16.mxu0 0
  %146 = vmatpush1.bf16.msra.mxu0 0
  %147 = vmatprep.subr.bf16.mxu0 0
  %148 = vmatpush1.bf16.msra.mxu0 0
  %149 = vmatprep.subr.bf16.mxu0 0
  %150 = vmatpush1.bf16.msra.mxu0 0
  %151 = vmatprep.subr.bf16.mxu0 0
  %152 = vmatpush1.bf16.msra.mxu0 0
  %153 = vmatprep.subr.bf16.mxu0 0
  %154 = vmatpush1.bf16.msra.mxu0 0
  %155 = vmatprep.subr.bf16.mxu0 0
  %156 = vmatpush1.bf16.msra.mxu0 0
  %157 = vmatprep.subr.bf16.mxu0 0
  %158 = vmatpush1.bf16.msra.mxu0 0
  %159 = vmatprep.mubr.bf16.mxu0 0
  %160 = vmatmul.mubr.bf16.gmra.mrb[0].mxu0 %v125
  %v161 = vpop.f32.mrb[0].mxu0
  %v162 = vadd.f32 0.0, %v161
  %v163 = vpop.f32.mrb[0].mxu0
  %v164 = vpop.f32.mrb[0].mxu0
  %v165 = vpop.f32.mrb[0].mxu0
  %166 = vdwg.mxu0
  %v167 = vadd.f32 %v88, %v162
  %v168 = vmax.f32 %v167, 0.0
  %v169 = vpack.c.bf16 %v168, %v168
  %v170 = vld [vmem:[%s3 + $0x30] sm:$0xf]
  %v171 = vld [vmem:[%s3 + $0x34] sm:$0xf]
  %v172 = vld [vmem:[%s3 + $0x38] sm:$0xf]
  %v173 = vld [vmem:[%s3 + $0x3c] sm:$0xf]
  %v174 = vld [vmem:[%s3 + $0x40] sm:$0xf]
  %v175 = vld [vmem:[%s3 + $0x44] sm:$0xf]
  %v176 = vld [vmem:[%s3 + $0x48] sm:$0xf]
  %v177 = vld [vmem:[%s3 + $0x4c] sm:$0xf]
  %v178 = vld [vmem:[%s4 + $0x1] sm:$0x1]
  %v179 = vlaneseq
  %v180 = vshrl.u32 %v179, 7
  %v181 = vsub.s32 0, %v180
  %v182 = vrot.slane %v178, %v181
  %v191 = vunpack.c.l.b16 %v170
  %v192 = vunpack.c.l.b16 %v171
  %v193 = vunpack.c.l.b16 %v172
  %v194 = vunpack.c.l.b16 %v173
  %v195 = vunpack.c.l.b16 %v174
  %v196 = vunpack.c.l.b16 %v175
  %v197 = vunpack.c.l.b16 %v176
  %v198 = vunpack.c.l.b16 %v177
  %v199 = vpack.c.b16 %v192, %v191
  %v200 = vpack.c.b16 %v194, %v193
  %v201 = vpack.c.b16 %v196, %v195
  %v202 = vpack.c.b16 %v198, %v197
  %v208 = vsel %vm123, %v169, 0
  %210 = vmatprep.subr.bf16.mxu0 0
  %211 = vmatpush1.bf16.msra.mxu0 %v199
  %212 = vmatprep.subr.bf16.mxu0 0
  %213 = vmatpush1.bf16.msra.mxu0 %v200
  %214 = vmatprep.subr.bf16.mxu0 0
  %215 = vmatpush1.bf16.msra.mxu0 %v201
  %216 = vmatprep.subr.bf16.mxu0 0
  %217 = vmatpush1.bf16.msra.mxu0 %v202
  %218 = vmatprep.subr.bf16.mxu0 0
  %219 = vmatpush1.bf16.msra.mxu0 0
  %220 = vmatprep.subr.bf16.mxu0 0
  %221 = vmatpush1.bf16.msra.mxu0 0
  %222 = vmatprep.subr.bf16.mxu0 0
  %223 = vmatpush1.bf16.msra.mxu0 0
  %224 = vmatprep.subr.bf16.mxu0 0
  %225 = vmatpush1.bf16.msra.mxu0 0
  %226 = vmatprep.subr.bf16.mxu0 0
  %227 = vmatpush1.bf16.msra.mxu0 0
  %228 = vmatprep.subr.bf16.mxu0 0
  %229 = vmatpush1.bf16.msra.mxu0 0
  %230 = vmatprep.subr.bf16.mxu0 0
  %231 = vmatpush1.bf16.msra.mxu0 0
  %232 = vmatprep.subr.bf16.mxu0 0
  %233 = vmatpush1.bf16.msra.mxu0 0
  %234 = vmatprep.subr.bf16.mxu0 0
  %235 = vmatpush1.bf16.msra.mxu0 0
  %236 = vmatprep.subr.bf16.mxu0 0
  %237 = vmatpush1.bf16.msra.mxu0 0
  %238 = vmatprep.subr.bf16.mxu0 0
  %239 = vmatpush1.bf16.msra.mxu0 0
  %240 = vmatprep.subr.bf16.mxu0 0
  %241 = vmatpush1.bf16.msra.mxu0 0
  %242 = vmatprep.mubr.bf16.mxu0 0
  %243 = vmatmul.mubr.bf16.gmra.mrb[0].mxu0 %v208
  %v244 = vpop.f32.mrb[0].mxu0
  %v245 = vadd.f32 %v182, %v244
  %v246 = vpop.f32.mrb[0].mxu0
  %v247 = vpop.f32.mrb[0].mxu0
  %v248 = vpop.f32.mrb[0].mxu0
  %249 = vdwg.mxu0
  %v250 = vxor.u32 %v245, 2147483648
  %v251 = vmul.f32 %v250, 1.442695
  %v252 = vpow.pop %v251
  %v253 = vadd.f32 %v252, 1.0
  %v254 = vrcp.pop %v253
  %v255 = vmul.f32 1.0, %v254
  %v256 = vpack.c.bf16 %v255, %v255
  %v257 = vld [vmem:[%s3 + $0x50] sm:$0xf]
  %v258 = vld [vmem:[%s3 + $0x54] sm:$0xf]
  %v259 = vld [vmem:[%s3 + $0x58] sm:$0xf]
  %v260 = vld [vmem:[%s3 + $0x5c] sm:$0xf]
  %v261 = vld [vmem:[%s4 + $0x2] sm:$0x1]
  %v262 = vlaneseq
  %v263 = vshrl.u32 %v262, 7
  %v264 = vsub.s32 0, %v263
  %v265 = vrot.slane %v261, %v264
  %v270 = vunpack.c.l.b16 %v257
  %v271 = vunpack.c.l.b16 %v258
  %v272 = vunpack.c.l.b16 %v259
  %v273 = vunpack.c.l.b16 %v260
  %v274 = vpack.c.b16 %v271, %v270
  %v275 = vpack.c.b16 %v273, %v272
  %v279 = vsel %vm40, %v256, 0
  %281 = vmatprep.subr.bf16.mxu0 0
  %282 = vmatpush1.bf16.msra.mxu0 %v274
  %283 = vmatprep.subr.bf16.mxu0 0
  %284 = vmatpush1.bf16.msra.mxu0 %v275
  %285 = vmatprep.subr.bf16.mxu0 0
  %286 = vmatpush1.bf16.msra.mxu0 0
  %287 = vmatprep.subr.bf16.mxu0 0
  %288 = vmatpush1.bf16.msra.mxu0 0
  %289 = vmatprep.subr.bf16.mxu0 0
  %290 = vmatpush1.bf16.msra.mxu0 0
  %291 = vmatprep.subr.bf16.mxu0 0
  %292 = vmatpush1.bf16.msra.mxu0 0
  %293 = vmatprep.subr.bf16.mxu0 0
  %294 = vmatpush1.bf16.msra.mxu0 0
  %295 = vmatprep.subr.bf16.mxu0 0
  %296 = vmatpush1.bf16.msra.mxu0 0
  %297 = vmatprep.subr.bf16.mxu0 0
  %298 = vmatpush1.bf16.msra.mxu0 0
  %299 = vmatprep.subr.bf16.mxu0 0
  %300 = vmatpush1.bf16.msra.mxu0 0
  %301 = vmatprep.subr.bf16.mxu0 0
  %302 = vmatpush1.bf16.msra.mxu0 0
  %303 = vmatprep.subr.bf16.mxu0 0
  %304 = vmatpush1.bf16.msra.mxu0 0
  %305 = vmatprep.subr.bf16.mxu0 0
  %306 = vmatpush1.bf16.msra.mxu0 0
  %307 = vmatprep.subr.bf16.mxu0 0
  %308 = vmatpush1.bf16.msra.mxu0 0
  %309 = vmatprep.subr.bf16.mxu0 0
  %310 = vmatpush1.bf16.msra.mxu0 0
  %311 = vmatprep.subr.bf16.mxu0 0
  %312 = vmatpush1.bf16.msra.mxu0 0
  %313 = vmatprep.mubr.bf16.mxu0 0
  %314 = vmatmul.mubr.bf16.gmra.mrb[0].mxu0 %v279
  %v315 = vpop.f32.mrb[0].mxu0
  %v316 = vadd.f32 %v265, %v315
  %v317 = vpop.f32.mrb[0].mxu0
  %v318 = vpop.f32.mrb[0].mxu0
  %v319 = vpop.f32.mrb[0].mxu0
  %320 = vdwg.mxu0
  %v321 = vld [vmem:[%s2] sm:$0xff]
  %v322 = vld [vmem:[%s2 + $0x8] sm:$0xff]
  %v323 = vpack.c.bf16 %v321, %v321
  %v324 = vpack.c.bf16 %v322, %v322
  %v325 = vld [vmem:[%s3 + $0x60] sm:$0xf]
  %v326 = vld [vmem:[%s3 + $0x64] sm:$0xf]
  %v327 = vld [vmem:[%s3 + $0x68] sm:$0xf]
  %v328 = vld [vmem:[%s3 + $0x6c] sm:$0xf]
  %v329 = vld [vmem:[%s3 + $0x70] sm:$0xf]
  %v330 = vld [vmem:[%s3 + $0x74] sm:$0xf]
  %v331 = vld [vmem:[%s3 + $0x78] sm:$0xf]
  %v332 = vld [vmem:[%s3 + $0x7c] sm:$0xf]
  %v333 = vld [vmem:[%s3 + $0x80] sm:$0xf]
  %v334 = vld [vmem:[%s3 + $0x84] sm:$0xf]
  %v335 = vld [vmem:[%s3 + $0x88] sm:$0xf]
  %v336 = vld [vmem:[%s3 + $0x8c] sm:$0xf]
  %v337 = vld [vmem:[%s3 + $0x90] sm:$0xf]
  %v338 = vld [vmem:[%s3 + $0x94] sm:$0xf]
  %v339 = vld [vmem:[%s3 + $0x98] sm:$0xf]
  %v340 = vld [vmem:[%s3 + $0x9c] sm:$0xf]
  %v341 = vld [vmem:[%s3 + $0xa0] sm:$0xf]
  %v342 = vld [vmem:[%s3 + $0xa4] sm:$0xf]
  %v343 = vld [vmem:[%s3 + $0xa8] sm:$0xf]
  %v344 = vld [vmem:[%s3 + $0xac] sm:$0xf]
  %v345 = vld [vmem:[%s3 + $0xb0] sm:$0x7]
  %v346 = vld [vmem:[%s4 + $0x3] sm:$0x1]
  %v347 = vlaneseq
  %v348 = vshrl.u32 %v347, 7
  %v349 = vsub.s32 0, %v348
  %v350 = vrot.slane %v346, %v349
  %v372 = vunpack.c.l.b16 %v325
  %v373 = vunpack.c.l.b16 %v326
  %v374 = vunpack.c.l.b16 %v327
  %v375 = vunpack.c.l.b16 %v328
  %v376 = vunpack.c.l.b16 %v329
  %v377 = vunpack.c.l.b16 %v330
  %v378 = vunpack.c.l.b16 %v331
  %v379 = vunpack.c.l.b16 %v332
  %v380 = vunpack.c.l.b16 %v333
  %v381 = vunpack.c.l.b16 %v334
  %v382 = vunpack.c.l.b16 %v335
  %v383 = vunpack.c.l.b16 %v336
  %v384 = vunpack.c.l.b16 %v337
  %v385 = vunpack.c.l.b16 %v338
  %v386 = vunpack.c.l.b16 %v339
  %v387 = vunpack.c.l.b16 %v340
  %v388 = vunpack.c.l.b16 %v341
  %v389 = vunpack.c.l.b16 %v342
  %v390 = vunpack.c.l.b16 %v343
  %v391 = vunpack.c.l.b16 %v344
  %v392 = vunpack.c.l.b16 %v345
  %v393 = vpack.c.b16 %v373, %v372
  %v394 = vpack.c.b16 %v375, %v374
  %v395 = vpack.c.b16 %v377, %v376
  %v396 = vpack.c.b16 %v379, %v378
  %v397 = vpack.c.b16 %v381, %v380
  %v398 = vpack.c.b16 %v383, %v382
  %v399 = vpack.c.b16 %v385, %v384
  %v400 = vpack.c.b16 %v387, %v386
  %v401 = vpack.c.b16 %v389, %v388
  %v402 = vpack.c.b16 %v391, %v390
  %v403 = vpack.c.b16 %v392, %v392
  %vm414 = vcmask 310272
  %v416 = vsel %vm414, %v324, 0
  %vm418 = vcmask 1042432
  %v420 = vsel %vm418, %v403, 0
  %422 = vmatprep.subr.bf16.mxu0 0
  %423 = vmatpush1.bf16.msra.mxu0 %v393
  %424 = vmatprep.subr.bf16.mxu0 0
  %425 = vmatpush1.bf16.msra.mxu0 %v394
  %426 = vmatprep.subr.bf16.mxu0 0
  %427 = vmatpush1.bf16.msra.mxu0 %v395
  %428 = vmatprep.subr.bf16.mxu0 0
  %429 = vmatpush1.bf16.msra.mxu0 %v396
  %430 = vmatprep.subr.bf16.mxu0 0
  %431 = vmatpush1.bf16.msra.mxu0 %v397
  %432 = vmatprep.subr.bf16.mxu0 0
  %433 = vmatpush1.bf16.msra.mxu0 %v398
  %434 = vmatprep.subr.bf16.mxu0 0
  %435 = vmatpush1.bf16.msra.mxu0 %v399
  %436 = vmatprep.subr.bf16.mxu0 0
  %437 = vmatpush1.bf16.msra.mxu0 %v400
  %438 = vmatprep.subr.bf16.mxu0 0
  %439 = vmatpush1.bf16.msra.mxu0 %v401
  %440 = vmatprep.subr.bf16.mxu0 0
  %441 = vmatpush1.bf16.msra.mxu0 %v402
  %442 = vmatprep.subr.bf16.mxu0 0
  %443 = vmatpush1.bf16.msra.mxu0 %v420
  %444 = vmatprep.subr.bf16.mxu0 0
  %445 = vmatpush1.bf16.msra.mxu0 0
  %446 = vmatprep.subr.bf16.mxu0 0
  %447 = vmatpush1.bf16.msra.mxu0 0
  %448 = vmatprep.subr.bf16.mxu0 0
  %449 = vmatpush1.bf16.msra.mxu0 0
  %450 = vmatprep.subr.bf16.mxu0 0
  %451 = vmatpush1.bf16.msra.mxu0 0
  %452 = vmatprep.subr.bf16.mxu0 0
  %453 = vmatpush1.bf16.msra.mxu0 0
  %454 = vmatprep.mubr.bf16.mxu0 %v416
  %455 = vmatmul.mubr.bf16.gmra.mrb[0].mxu0 %v323
  %v456 = vpop.f32.mrb[0].mxu0
  %v457 = vadd.f32 %v350, %v456
  %v458 = vpop.f32.mrb[0].mxu0
  %v459 = vpop.f32.mrb[0].mxu0
  %v460 = vpop.f32.mrb[0].mxu0
  %461 = vdwg.mxu0
  %v462 = vmax.f32 %v457, 0.0
  %v463 = vpack.c.bf16 %v462, %v462
  %v464 = vld [vmem:[%s3 + $0xb8] sm:$0xf]
  %v465 = vld [vmem:[%s3 + $0xbc] sm:$0xf]
  %v466 = vld [vmem:[%s3 + $0xc0] sm:$0xf]
  %v467 = vld [vmem:[%s3 + $0xc4] sm:$0xf]
  %v468 = vld [vmem:[%s3 + $0xc8] sm:$0xf]
  %v469 = vld [vmem:[%s3 + $0xcc] sm:$0xf]
  %v470 = vld [vmem:[%s3 + $0xd0] sm:$0xf]
  %v471 = vld [vmem:[%s3 + $0xd4] sm:$0xf]
  %v472 = vld [vmem:[%s4 + $0x4] sm:$0x1]
  %v473 = vlaneseq
  %v474 = vshrl.u32 %v473, 7
  %v475 = vsub.s32 0, %v474
  %v476 = vrot.slane %v472, %v475
  %v485 = vunpack.c.l.b16 %v464
  %v486 = vunpack.c.l.b16 %v465
  %v487 = vunpack.c.l.b16 %v466
  %v488 = vunpack.c.l.b16 %v467
  %v489 = vunpack.c.l.b16 %v468
  %v490 = vunpack.c.l.b16 %v469
  %v491 = vunpack.c.l.b16 %v470
  %v492 = vunpack.c.l.b16 %v471
  %v493 = vpack.c.b16 %v486, %v485
  %v494 = vpack.c.b16 %v488, %v487
  %v495 = vpack.c.b16 %v490, %v489
  %v496 = vpack.c.b16 %v492, %v491
  %v502 = vsel %vm123, %v463, 0
  %504 = vmatprep.subr.bf16.mxu0 0
  %505 = vmatpush1.bf16.msra.mxu0 %v493
  %506 = vmatprep.subr.bf16.mxu0 0
  %507 = vmatpush1.bf16.msra.mxu0 %v494
  %508 = vmatprep.subr.bf16.mxu0 0
  %509 = vmatpush1.bf16.msra.mxu0 %v495
  %510 = vmatprep.subr.bf16.mxu0 0
  %511 = vmatpush1.bf16.msra.mxu0 %v496
  %512 = vmatprep.subr.bf16.mxu0 0
  %513 = vmatpush1.bf16.msra.mxu0 0
  %514 = vmatprep.subr.bf16.mxu0 0
  %515 = vmatpush1.bf16.msra.mxu0 0
  %516 = vmatprep.subr.bf16.mxu0 0
  %517 = vmatpush1.bf16.msra.mxu0 0
  %518 = vmatprep.subr.bf16.mxu0 0
  %519 = vmatpush1.bf16.msra.mxu0 0
  %520 = vmatprep.subr.bf16.mxu0 0
  %521 = vmatpush1.bf16.msra.mxu0 0
  %522 = vmatprep.subr.bf16.mxu0 0
  %523 = vmatpush1.bf16.msra.mxu0 0
  %524 = vmatprep.subr.bf16.mxu0 0
  %525 = vmatpush1.bf16.msra.mxu0 0
  %526 = vmatprep.subr.bf16.mxu0 0
  %527 = vmatpush1.bf16.msra.mxu0 0
  %528 = vmatprep.subr.bf16.mxu0 0
  %529 = vmatpush1.bf16.msra.mxu0 0
  %530 = vmatprep.subr.bf16.mxu0 0
  %531 = vmatpush1.bf16.msra.mxu0 0
  %532 = vmatprep.subr.bf16.mxu0 0
  %533 = vmatpush1.bf16.msra.mxu0 0
  %534 = vmatprep.subr.bf16.mxu0 0
  %535 = vmatpush1.bf16.msra.mxu0 0
  %536 = vmatprep.mubr.bf16.mxu0 0
  %537 = vmatmul.mubr.bf16.gmra.mrb[0].mxu0 %v502
  %v538 = vpop.f32.mrb[0].mxu0
  %v539 = vadd.f32 %v476, %v538
  %v540 = vpop.f32.mrb[0].mxu0
  %v541 = vpop.f32.mrb[0].mxu0
  %v542 = vpop.f32.mrb[0].mxu0
  %543 = vdwg.mxu0
  %v544 = vmax.f32 %v539, 0.0
  %v545 = vpack.c.bf16 %v544, %v544
  %v546 = vld [vmem:[%s3 + $0xd8] sm:$0xf]
  %v547 = vld [vmem:[%s3 + $0xdc] sm:$0xf]
  %v548 = vld [vmem:[%s3 + $0xe0] sm:$0xf]
  %v549 = vld [vmem:[%s3 + $0xe4] sm:$0xf]
  %v550 = vld [vmem:[%s4 + $0x5] sm:$0x1]
  %v551 = vlaneseq
  %v552 = vshrl.u32 %v551, 7
  %v553 = vsub.s32 0, %v552
  %v554 = vrot.slane %v550, %v553
  %v559 = vunpack.c.l.b16 %v546
  %v560 = vunpack.c.l.b16 %v547
  %v561 = vunpack.c.l.b16 %v548
  %v562 = vunpack.c.l.b16 %v549
  %v563 = vpack.c.b16 %v560, %v559
  %v564 = vpack.c.b16 %v562, %v561
  %v568 = vsel %vm40, %v545, 0
  %570 = vmatprep.subr.bf16.mxu0 0
  %571 = vmatpush1.bf16.msra.mxu0 %v563
  %572 = vmatprep.subr.bf16.mxu0 0
  %573 = vmatpush1.bf16.msra.mxu0 %v564
  %574 = vmatprep.subr.bf16.mxu0 0
  %575 = vmatpush1.bf16.msra.mxu0 0
  %576 = vmatprep.subr.bf16.mxu0 0
  %577 = vmatpush1.bf16.msra.mxu0 0
  %578 = vmatprep.subr.bf16.mxu0 0
  %579 = vmatpush1.bf16.msra.mxu0 0
  %580 = vmatprep.subr.bf16.mxu0 0
  %581 = vmatpush1.bf16.msra.mxu0 0
  %582 = vmatprep.subr.bf16.mxu0 0
  %583 = vmatpush1.bf16.msra.mxu0 0
  %584 = vmatprep.subr.bf16.mxu0 0
  %585 = vmatpush1.bf16.msra.mxu0 0
  %586 = vmatprep.subr.bf16.mxu0 0
  %587 = vmatpush1.bf16.msra.mxu0 0
  %588 = vmatprep.subr.bf16.mxu0 0
  %589 = vmatpush1.bf16.msra.mxu0 0
  %590 = vmatprep.subr.bf16.mxu0 0
  %591 = vmatpush1.bf16.msra.mxu0 0
  %592 = vmatprep.subr.bf16.mxu0 0
  %593 = vmatpush1.bf16.msra.mxu0 0
  %594 = vmatprep.subr.bf16.mxu0 0
  %595 = vmatpush1.bf16.msra.mxu0 0
  %596 = vmatprep.subr.bf16.mxu0 0
  %597 = vmatpush1.bf16.msra.mxu0 0
  %598 = vmatprep.subr.bf16.mxu0 0
  %599 = vmatpush1.bf16.msra.mxu0 0
  %600 = vmatprep.subr.bf16.mxu0 0
  %601 = vmatpush1.bf16.msra.mxu0 0
  %602 = vmatprep.mubr.bf16.mxu0 0
  %603 = vmatmul.mubr.bf16.gmra.mrb[0].mxu0 %v568
  %v604 = vpop.f32.mrb[0].mxu0
  %v605 = vadd.f32 %v554, %v604
  %v606 = vpop.f32.mrb[0].mxu0
  %v607 = vpop.f32.mrb[0].mxu0
  %v608 = vpop.f32.mrb[0].mxu0
  %609 = vdwg.mxu0
  %v610 = vmax.f32 %v605, 0.0
  %v611 = vpack.c.bf16 %v316, %v316
  %v612 = vld [vmem:[%s3 + $0xe8] sm:$0xf]
  %v613 = vld [vmem:[%s3 + $0xec] sm:$0xf]
  %v614 = vpack.c.bf16 %v610, %v610
  %v615 = vld [vmem:[%s3 + $0xf0] sm:$0xf]
  %v616 = vld [vmem:[%s3 + $0xf4] sm:$0xf]
  %v619 = vunpack.c.l.b16 %v615
  %v620 = vunpack.c.l.b16 %v616
  %v621 = vpack.c.b16 %v620, %v619
  %vm623 = vcmask 130048
  %v625 = vsel %vm623, %v614, 0
  %627 = vmatprep.subr.bf16.mxu0 0
  %628 = vmatpush1.bf16.msra.mxu0 %v621
  %629 = vmatprep.subr.bf16.mxu0 0
  %630 = vmatpush1.bf16.msra.mxu0 0
  %631 = vmatprep.subr.bf16.mxu0 0
  %632 = vmatpush1.bf16.msra.mxu0 0
  %633 = vmatprep.subr.bf16.mxu0 0
  %634 = vmatpush1.bf16.msra.mxu0 0
  %635 = vmatprep.subr.bf16.mxu0 0
  %636 = vmatpush1.bf16.msra.mxu0 0
  %637 = vmatprep.subr.bf16.mxu0 0
  %638 = vmatpush1.bf16.msra.mxu0 0
  %639 = vmatprep.subr.bf16.mxu0 0
  %640 = vmatpush1.bf16.msra.mxu0 0
  %641 = vmatprep.subr.bf16.mxu0 0
  %642 = vmatpush1.bf16.msra.mxu0 0
  %643 = vmatprep.subr.bf16.mxu0 0
  %644 = vmatpush1.bf16.msra.mxu0 0
  %645 = vmatprep.subr.bf16.mxu0 0
  %646 = vmatpush1.bf16.msra.mxu0 0
  %647 = vmatprep.subr.bf16.mxu0 0
  %648 = vmatpush1.bf16.msra.mxu0 0
  %649 = vmatprep.subr.bf16.mxu0 0
  %650 = vmatpush1.bf16.msra.mxu0 0
  %651 = vmatprep.subr.bf16.mxu0 0
  %652 = vmatpush1.bf16.msra.mxu0 0
  %653 = vmatprep.subr.bf16.mxu0 0
  %654 = vmatpush1.bf16.msra.mxu0 0
  %655 = vmatprep.subr.bf16.mxu0 0
  %656 = vmatpush1.bf16.msra.mxu0 0
  %657 = vmatprep.subr.bf16.mxu0 0
  %658 = vmatpush1.bf16.msra.mxu0 0
  %659 = vmatprep.mubr.bf16.mxu0 0
  %660 = vmatmul.mubr.bf16.gmra.mrb[0].mxu0 %v625
  %v661 = vpop.f32.mrb[0].mxu0
  %v662 = vadd.f32 0.0, %v661
  %v663 = vpop.f32.mrb[0].mxu0
  %v664 = vpop.f32.mrb[0].mxu0
  %v665 = vpop.f32.mrb[0].mxu0
  %666 = vdwg.mxu0
  %v669 = vunpack.c.l.b16 %v612
  %v670 = vunpack.c.l.b16 %v613
  %v671 = vpack.c.b16 %v670, %v669
  %v674 = vsel %vm623, %v611, 0
  %676 = vmatprep.subr.bf16.mxu0 0
  %677 = vmatpush1.bf16.msra.mxu0 %v671
  %678 = vmatprep.subr.bf16.mxu0 0
  %679 = vmatpush1.bf16.msra.mxu0 0
  %680 = vmatprep.subr.bf16.mxu0 0
  %681 = vmatpush1.bf16.msra.mxu0 0
  %682 = vmatprep.subr.bf16.mxu0 0
  %683 = vmatpush1.bf16.msra.mxu0 0
  %684 = vmatprep.subr.bf16.mxu0 0
  %685 = vmatpush1.bf16.msra.mxu0 0
  %686 = vmatprep.subr.bf16.mxu0 0
  %687 = vmatpush1.bf16.msra.mxu0 0
  %688 = vmatprep.subr.bf16.mxu0 0
  %689 = vmatpush1.bf16.msra.mxu0 0
  %690 = vmatprep.subr.bf16.mxu0 0
  %691 = vmatpush1.bf16.msra.mxu0 0
  %692 = vmatprep.subr.bf16.mxu0 0
  %693 = vmatpush1.bf16.msra.mxu0 0
  %694 = vmatprep.subr.bf16.mxu0 0
  %695 = vmatpush1.bf16.msra.mxu0 0
  %696 = vmatprep.subr.bf16.mxu0 0
  %697 = vmatpush1.bf16.msra.mxu0 0
  %698 = vmatprep.subr.bf16.mxu0 0
  %699 = vmatpush1.bf16.msra.mxu0 0
  %700 = vmatprep.subr.bf16.mxu0 0
  %701 = vmatpush1.bf16.msra.mxu0 0
  %702 = vmatprep.subr.bf16.mxu0 0
  %703 = vmatpush1.bf16.msra.mxu0 0
  %704 = vmatprep.subr.bf16.mxu0 0
  %705 = vmatpush1.bf16.msra.mxu0 0
  %706 = vmatprep.subr.bf16.mxu0 0
  %707 = vmatpush1.bf16.msra.mxu0 0
  %708 = vmatprep.mubr.bf16.mxu0 0
  %709 = vmatmul.mubr.bf16.gmra.mrb[0].mxu0 %v674
  %v710 = vpop.f32.mrb[0].mxu0
  %v711 = vadd.f32 %v662, %v710
  %v712 = vpop.f32.mrb[0].mxu0
  %v713 = vpop.f32.mrb[0].mxu0
  %v714 = vpop.f32.mrb[0].mxu0
  %715 = vdwg.mxu0
  %v716 = vld [vmem:[%s4 + $0x6] sm:$0x1]
  %v717 = vlaneseq
  %v718 = vshrl.u32 %v717, 7
  %v719 = vsub.s32 0, %v718
  %v720 = vrot.slane %v716, %v719
  %v721 = vadd.f32 %v711, %v720
  %v722 = vmax.f32 %v721, 0.0
  %v723 = vpack.c.bf16 %v722, %v722
  %v724 = vld [vmem:[%s3 + $0xf8] sm:$0xf]
  %v725 = vld [vmem:[%s3 + $0xfc] sm:$0xf]
  %v726 = vld [vmem:[%s3 + $0x100] sm:$0xf]
  %v727 = vld [vmem:[%s3 + $0x104] sm:$0xf]
  %v728 = vld [vmem:[%s4 + $0x7] sm:$0x1]
  %v729 = vlaneseq
  %v730 = vshrl.u32 %v729, 7
  %v731 = vsub.s32 0, %v730
  %v732 = vrot.slane %v728, %v731
  %v737 = vunpack.c.l.b16 %v724
  %v738 = vunpack.c.l.b16 %v725
  %v739 = vunpack.c.l.b16 %v726
  %v740 = vunpack.c.l.b16 %v727
  %v741 = vpack.c.b16 %v738, %v737
  %v742 = vpack.c.b16 %v740, %v739
  %v746 = vsel %vm40, %v723, 0
  %748 = vmatprep.subr.bf16.mxu0 0
  %749 = vmatpush1.bf16.msra.mxu0 %v741
  %750 = vmatprep.subr.bf16.mxu0 0
  %751 = vmatpush1.bf16.msra.mxu0 %v742
  %752 = vmatprep.subr.bf16.mxu0 0
  %753 = vmatpush1.bf16.msra.mxu0 0
  %754 = vmatprep.subr.bf16.mxu0 0
  %755 = vmatpush1.bf16.msra.mxu0 0
  %756 = vmatprep.subr.bf16.mxu0 0
  %757 = vmatpush1.bf16.msra.mxu0 0
  %758 = vmatprep.subr.bf16.mxu0 0
  %759 = vmatpush1.bf16.msra.mxu0 0
  %760 = vmatprep.subr.bf16.mxu0 0
  %761 = vmatpush1.bf16.msra.mxu0 0
  %762 = vmatprep.subr.bf16.mxu0 0
  %763 = vmatpush1.bf16.msra.mxu0 0
  %764 = vmatprep.subr.bf16.mxu0 0
  %765 = vmatpush1.bf16.msra.mxu0 0
  %766 = vmatprep.subr.bf16.mxu0 0
  %767 = vmatpush1.bf16.msra.mxu0 0
  %768 = vmatprep.subr.bf16.mxu0 0
  %769 = vmatpush1.bf16.msra.mxu0 0
  %770 = vmatprep.subr.bf16.mxu0 0
  %771 = vmatpush1.bf16.msra.mxu0 0
  %772 = vmatprep.subr.bf16.mxu0 0
  %773 = vmatpush1.bf16.msra.mxu0 0
  %774 = vmatprep.subr.bf16.mxu0 0
  %775 = vmatpush1.bf16.msra.mxu0 0
  %776 = vmatprep.subr.bf16.mxu0 0
  %777 = vmatpush1.bf16.msra.mxu0 0
  %778 = vmatprep.subr.bf16.mxu0 0
  %779 = vmatpush1.bf16.msra.mxu0 0
  %780 = vmatprep.mubr.bf16.mxu0 0
  %781 = vmatmul.mubr.bf16.gmra.mrb[0].mxu0 %v746
  %v782 = vpop.f32.mrb[0].mxu0
  %v783 = vadd.f32 %v732, %v782
  %v784 = vpop.f32.mrb[0].mxu0
  %v785 = vpop.f32.mrb[0].mxu0
  %v786 = vpop.f32.mrb[0].mxu0
  %787 = vdwg.mxu0
  %v788 = vmax.f32 %v783, 0.0
  %v789 = vld [vmem:[%s3 + $0x108] sm:$0x1]
  %v790 = vunpack.c.l.bf16 %v789
  %v791 = vlaneseq
  %v792 = vshrl.u32 %v791, 7
  %v793 = vsub.s32 0, %v792
  %v794 = vrot.slane %v790, %v793
  %v795 = vmul.f32 %v788, %v794
  %v796 = vsel %vm40, %v795, 0.0
  %797 = vadd.xlane.f32.xlu0 %v796
  %v798 = vpop.xlane.xlu0 %797
  %v799 = vld [vmem:[%s4 + $0x8] sm:$0x1]
  %v800 = vlaneseq
  %v801 = vshrl.u32 %v800, 7
  %v802 = vsub.s32 0, %v801
  %v803 = vrot.slane %v799, %v802
  %v804 = vadd.f32 %v798, %v803
  %v805 = vxor.u32 %v804, 2147483648
  %v806 = vmul.f32 %v805, 1.442695
  %v807 = vpow.pop %v806
  %v808 = vadd.f32 %v807, 1.0
  %v809 = vrcp.pop %v808
  %v810 = vmul.f32 1.0, %v809
  %vm811 = vcmask 7168
  %812 = vst.msk [vmem:[%s5] sm:$0xff] %vm811, %v810
  // Predicated region
  $region22: #{tpu_custom_call.1} parent=0 // pred_check
    _
  $region23: #{tpu_custom_call.1} parent=0 // pred_check_branch
    %814 = sbr.rel (0) target = $region25
  $region24: #{tpu_custom_call.1} parent=0 // pred_region
    _
  $region25: #{tpu_custom_call.1} parent=0 // pred_fallthru
    _
  // Predicated region
  $region26: #{tpu_custom_call.1} parent=0 // pred_check
    _
  $region27: #{tpu_custom_call.1} parent=0 // pred_check_branch
    %816 = sbr.rel (0) target = $region29
  $region28: #{tpu_custom_call.1} parent=0 // pred_region
    _
  $region29: #{tpu_custom_call.1} parent=0 // pred_fallthru
    _

</llo_original>
